<compile_context>
chip_gen: v6e
topology: v6e:2x2x1
jax: 0.10.0
libtpu: 0.0.40
codegen_flags: <defaults>
</compile_context>

<pallas_src>
import math

import jax
import jax.numpy as jnp
import numpy as np
from jax.experimental import pallas as pl
from jax.experimental.pallas import tpu as pltpu

_MIB = 1024 * 1024


# ----------------------------------------------------------------------------
# Zero-copy aliased identity (default path).
# ----------------------------------------------------------------------------
def _alias_kernel(x_ref, o_ref):
    # Output aliases the input buffer (input_output_aliases={0: 0}); nothing
    # needs to move.  `touch` pins a fake read+write dependency so the aliased
    # output is treated as produced by this call.
    pltpu.touch(o_ref)


def _identity_alias(x: jax.Array) -> jax.Array:
    return pl.pallas_call(
        _alias_kernel,
        out_shape=jax.ShapeDtypeStruct(x.shape, x.dtype),
        in_specs=[pl.BlockSpec(memory_space=pl.ANY)],
        out_specs=pl.BlockSpec(memory_space=pl.ANY),
        input_output_aliases={0: 0},
    )(x)


# ----------------------------------------------------------------------------
# Streaming-copy identity (opt-in, when a fresh output buffer is required).
# ----------------------------------------------------------------------------
def _copy_kernel(x_ref, o_ref):
    o_ref[...] = x_ref[...]


def _choose_lane_width(total: int) -> int:
    """Largest lane width (multiple of 128) that evenly divides `total`."""
    for lane in (16384, 8192, 4096, 2048, 1024, 512, 256, 128):
        if total % lane == 0:
            return lane
    return 0


def _identity_copy(x: jax.Array, *, target_block_bytes: int = 4 * _MIB) -> jax.Array:
    orig_shape = x.shape
    dtype = x.dtype
    total = math.prod(orig_shape) if orig_shape else 1
    if total == 0:
        return x

    itemsize = jnp.dtype(dtype).itemsize
    flat = x.reshape(total)

    # If the element count is not 128-divisible, pad the flat view up to the
    # next multiple of 128 and slice afterwards (never one giant VMEM block).
    lane = _choose_lane_width(total)
    pad = 0
    if lane == 0:
        pad = (-total) % 128
        flat = jnp.pad(flat, (0, pad))
        lane = _choose_lane_width(total + pad)

    padded_total = total + pad
    rows = padded_total // lane
    bytes_per_row = lane * itemsize

    # ~4 MiB contiguous row slabs (full last dim -> fully contiguous DMAs).
    row_tile = max(1, target_block_bytes // bytes_per_row)
    if row_tile >= rows:
        row_tile = rows                         # single full-extent block
    else:
        row_tile = max(8, (row_tile // 8) * 8)  # sublane-aligned partial blocks

    block_bytes = row_tile * bytes_per_row
    # 2 buffers x (in + out) x block + headroom; explicit so v5e's 16 MiB
    # scoped default never OOMs and v7x's 64 MiB physical VMEM is respected.
    vmem_limit = int(min(max(4 * block_bytes + 4 * _MIB, 8 * _MIB), 32 * _MIB))

    grid = (pl.cdiv(rows, row_tile),)
    x2d = flat.reshape(rows, lane)

    out2d = pl.pallas_call(
        _copy_kernel,
        out_shape=jax.ShapeDtypeStruct((rows, lane), dtype),
        grid_spec=pltpu.PrefetchScalarGridSpec(
            num_scalar_prefetch=0,
            grid=grid,
            in_specs=[pl.BlockSpec((row_tile, lane), lambda i: (i, 0))],
            out_specs=pl.BlockSpec((row_tile, lane), lambda i: (i, 0)),
        ),
        compiler_params=pltpu.CompilerParams(
            dimension_semantics=("parallel",),
            vmem_limit_bytes=vmem_limit,
        ),
        cost_estimate=pl.CostEstimate(
            flops=0,
            transcendentals=0,
            bytes_accessed=2 * padded_total * itemsize,
        ),
    )(x2d)

    out_flat = out2d.reshape(padded_total)
    if pad:
        out_flat = out_flat[:total]
    return out_flat.reshape(orig_shape)


# ----------------------------------------------------------------------------
# Public wrapper: Pallas equivalent of myNetEmbedding.forward(x) == x.
# ----------------------------------------------------------------------------
def my_net_embedding(x: jax.Array, *, copy: bool = False) -> jax.Array:
    total = math.prod(x.shape) if x.shape else 1
    if total == 0:
        return x
    if copy:
        return _identity_copy(x)
    try:
        return _identity_alias(x)
    except Exception:
        # Graceful fallback if the aliased no-op lowering is unavailable on
        # this jax/libtpu version: fall back to the streaming copy.
        return _identity_copy(x)


if __name__ == "__main__":
    key = jax.random.PRNGKey(0)

    # Small point-cloud-like input: batch=2, channels=3 (xyz), points=256.
    B, C, N = 2, 3, 256
    x = jax.random.normal(key, (B, C, N), dtype=jnp.float32)
    x_np = np.asarray(x)  # host snapshot, independent of any buffer aliasing

    # Streaming-copy path (fresh output buffer).
    y_copy = my_net_embedding(x, copy=True)
    jax.block_until_ready(y_copy)
    assert y_copy.shape == x.shape and y_copy.dtype == x.dtype
    assert np.array_equal(np.asarray(y_copy), x_np)

    # Non-128-divisible element count exercises the pad-and-slice path.
    x_odd = jax.random.normal(jax.random.PRNGKey(1), (2, 3, 250), dtype=jnp.float32)
    x_odd_np = np.asarray(x_odd)
    y_odd = my_net_embedding(x_odd, copy=True)
    jax.block_until_ready(y_odd)
    assert y_odd.shape == x_odd.shape and y_odd.dtype == x_odd.dtype
    assert np.array_equal(np.asarray(y_odd), x_odd_np)

    # Default zero-copy aliased path (run last; x is not reused afterwards).
    y = my_net_embedding(x)
    jax.block_until_ready(y)
    assert y.shape == x.shape and y.dtype == x.dtype
    assert np.array_equal(np.asarray(y), x_np)

    print("KERNEL_OK")
</pallas_src>

<mosaic_0001>
module attributes {stable_mosaic.version = 11 : i64} {
  func.func @_copy_kernel(%arg0: i32, %arg1: memref<3x512xf32, #tpu.memory_space<vmem>>, %arg2: memref<3x512xf32, #tpu.memory_space<vmem>>) attributes {dimension_semantics = [#tpu.dimension_semantics<parallel>], iteration_bounds = array<i64: 1>, scalar_prefetch = 0 : i64, scratch_operands = 0 : i64, tpu.core_type = #tpu.core_type<tc>, window_params = [{transform_indices = @transform_0, window_bounds = array<i64: 3, 512>}, {transform_indices = @transform_1, window_bounds = array<i64: 3, 512>}]} {
    %c0 = arith.constant 0 : index
    %c0_0 = arith.constant 0 : index
    %0 = vector.load %arg1[%c0, %c0_0] : memref<3x512xf32, #tpu.memory_space<vmem>>, vector<3x512xf32>
    %c0_1 = arith.constant 0 : index
    %c0_2 = arith.constant 0 : index
    %1 = vector.load %arg2[%c0_1, %c0_2] : memref<3x512xf32, #tpu.memory_space<vmem>>, vector<3x512xf32>
    tpu.vector_store %arg2[%c0_1, %c0_2], %0 {strides = array<i32>} : memref<3x512xf32, #tpu.memory_space<vmem>>, vector<3x512xf32>,
    return
  }
  func.func @transform_0(%arg0: i32) -> (i32, i32) {
    %c0_i32 = arith.constant 0 : i32
    %c0_i32_0 = arith.constant 0 : i32
    return %arg0, %c0_i32 : i32, i32
  }
  func.func @transform_1(%arg0: i32) -> (i32, i32) {
    %c0_i32 = arith.constant 0 : i32
    %c0_i32_0 = arith.constant 0 : i32
    return %arg0, %c0_i32 : i32, i32
  }
}

</mosaic_0001>

<llo_original>
// kernel: tpu_custom_call.1
$region0: #{tpu_custom_call.1}
  #allocation0 [shape = 'u32[]', space=smem, size = 0x4, offset = 0x4, fixed_abs, tag = 'smem constant byte address 0x4 - core index']
  #allocation1 [shape = 'u32[144,128]{1,0:T(1,128)}', space=vmem, size = 0x12000, scoped, tag = 'internal scratch']
  %s0 = inlined_call_operand.hbm [shape: f32[3,512], index: 0, kind: input, shape index: {}]
  %s1 = inlined_call_operand.hbm [shape: f32[3,512], index: 1, kind: output, shape index: {}]
  %s2 = sld [smem:[#allocation0]]
  $region18: #{tpu_custom_call.1} parent=0
    _
  %s4 = ssub.s32 1, %s2
  %s5 = scalar_select 0, %s4, %s2
  $region1: #{tpu_custom_call.1} parent=0
    #allocation2 [shape = 'u8[8192]{0}', space=vmem, size = 0x2000, scoped, tag = 'input window, operand 0, single buffered']
    #allocation3 [shape = 's32[1]{0}', space=sflag, size = 0x4, scoped, tag = 'scoped memory for tpu_custom_call.1']
    #allocation4 [shape = 's32[1]{0}', space=sflag, size = 0x4, scoped, tag = 'scoped memory for tpu_custom_call.1']
    #allocation5 [shape = 'u8[8192]{0}', space=vmem, size = 0x2000, scoped, tag = 'output window, operand 0, single buffered']
    %6 = vsyncpa [#allocation3], 0
    %7 = vsyncpa [#allocation4], 0
    // Predicated region
    $region2: #{tpu_custom_call.1} parent=1 // pred_check
      _
    $region3: #{tpu_custom_call.1} parent=1 // pred_check_branch
      %9 = sbr.rel (0) target = $region5
    $region4: #{tpu_custom_call.1} parent=1 // pred_region
      %s11 = ssub.s32 256, 256
      %12 = vsyncadd [#allocation3], %s11
      %s14 = sshll.u32 [#allocation2], 4
      %s15 = int_to_ptr.vmem [resolvable:$true] %s14
      %17 = dma.hbm_to_vmem [thread:$0]  %s0, 256, %s15, [#allocation3]
    $region5: #{tpu_custom_call.1} parent=1 // pred_fallthru
      _
    // Predicated region
    $region6: #{tpu_custom_call.1} parent=1 // pred_check
      _
    $region7: #{tpu_custom_call.1} parent=1 // pred_check_branch
      %19 = sbr.rel (0) target = $region9
    $region8: #{tpu_custom_call.1} parent=1 // pred_region
      %20 = dma.done [#allocation3], 256
    $region9: #{tpu_custom_call.1} parent=1 // pred_fallthru
      _
    %v21 = vld [vmem:[#allocation2] sm:$0x77]
    %v22 = vld [vmem:[#allocation2 + $0x8] sm:$0x77]
    %23 = vst [vmem:[#allocation5] sm:$0x77] %v21
    %24 = vst [vmem:[#allocation5 + $0x8] sm:$0x77] %v22
    // Predicated region
    $region10: #{tpu_custom_call.1} parent=1 // pred_check
      _
    $region11: #{tpu_custom_call.1} parent=1 // pred_check_branch
      %26 = sbr.rel (0) target = $region13
    $region12: #{tpu_custom_call.1} parent=1 // pred_region
      %s28 = ssub.s32 256, 256
      %29 = vsyncadd [#allocation4], %s28
      %s31 = sshll.u32 [#allocation5], 4
      %s32 = int_to_ptr.vmem [resolvable:$true] %s31
      %34 = dma.vmem_to_hbm [thread:$0]  %s32, 256, %s1, [#allocation4]
    $region13: #{tpu_custom_call.1} parent=1 // pred_fallthru
      _
    // Predicated region
    $region14: #{tpu_custom_call.1} parent=1 // pred_check
      _
    $region15: #{tpu_custom_call.1} parent=1 // pred_check_branch
      %36 = sbr.rel (0) target = $region17
    $region16: #{tpu_custom_call.1} parent=1 // pred_region
      %37 = dma.done [#allocation4], 256
    $region17: #{tpu_custom_call.1} parent=1 // pred_fallthru
      _
    %38 = vsyncpa [#allocation3], 1
    %39 = vsyncpa [#allocation4], 1

</llo_original>
